<compile_context>
chip_gen: v5e
topology: v5e:2x2
jax: 0.10.0
libtpu: 0.0.40
codegen_flags: <defaults>
</compile_context>

<pallas_src>
import jax
import jax.numpy as jnp
from jax.experimental import pallas as pl
from jax.experimental.pallas import tpu as pltpu


# ------------------------------- the kernel --------------------------------

def _focus_kernel(x_ref, w_ref, b_ref, o_ref):
    # x_ref : (1, K4, TM) bf16  channel-major space-to-depth input tile
    # w_ref : (C2, K4)    bf16  BN-folded 1x1 conv weight
    # b_ref : (C2, 1)     f32   BN-folded bias
    # o_ref : (1, C2, TM) bf16/f32  NCHW output tile (spatial flattened, lane-dense)
    acc = jnp.dot(w_ref[...], x_ref[0], preferred_element_type=jnp.float32)  # (C2, TM)
    acc = acc + b_ref[...]
    o_ref[0] = (acc * jax.nn.sigmoid(acc)).astype(o_ref.dtype)               # SiLU


# --------------------------- tile-size selection ----------------------------

def _round_up(x, m):
    return ((x + m - 1) // m) * m


def _sublanes(dtype):
    return {1: 32, 2: 16, 4: 8}[jnp.dtype(dtype).itemsize]


def _padded_bytes(rows, cols, dtype):
    """VMEM bytes of a (rows, cols) tile after (sublane, 128-lane) padding."""
    return (_round_up(rows, _sublanes(dtype)) * _round_up(cols, 128)
            * jnp.dtype(dtype).itemsize)


def _vmem_capacity():
    try:
        return int(getattr(pltpu.get_tpu_info(), "vmem_capacity_bytes",
                           64 * 1024 * 1024))
    except Exception:
        return 64 * 1024 * 1024   # conservative (v7x per-TC) default


def _pick_tm(m_total, k4, c2, n_batch, out_dtype, vmem_cap):
    """Largest lane-dense spatial tile whose padded, double-buffered footprint
    fits a fraction of VMEM; keeps >= 2 grid steps when a legal split exists."""
    budget = vmem_cap // 3

    def footprint(tm):
        x_t = _padded_bytes(k4, tm, jnp.bfloat16)
        o_t = _padded_bytes(c2, tm, out_dtype)
        acc = _padded_bytes(c2, tm, jnp.float32)
        w_t = _padded_bytes(c2, k4, jnp.bfloat16)
        b_t = _padded_bytes(c2, 1, jnp.float32)
        return 2 * (x_t + o_t + w_t + b_t) + 3 * acc   # dbl-buffered tiles + f32 temps

    cands = [d for d in range(128, m_total + 1, 128)
             if m_total % d == 0 and footprint(d) <= budget]
    if cands:
        tm = max(cands)
    elif footprint(m_total) <= budget:
        tm = m_total                       # small arrays: take the full extent
    else:
        tm = 128                           # ragged fallback (last block masked)
        while tm + 128 < m_total and footprint(tm + 128) <= budget:
            tm += 128
    # v7x megacore: keep at least two parallel grid steps when legally possible.
    if n_batch * pl.cdiv(m_total, tm) < 2:
        smaller = [d for d in cands if d <= m_total // 2]
        if smaller:
            tm = max(smaller)
    return tm


# ------------------------------ host wrappers -------------------------------

def _space_to_depth(x):
    """PyTorch Focus channel order: [::2,::2], [1::2,::2], [::2,1::2], [1::2,1::2]."""
    return jnp.concatenate(
        [x[..., ::2, ::2], x[..., 1::2, ::2], x[..., ::2, 1::2], x[..., 1::2, 1::2]],
        axis=1)


def space_to_depth_pack(x_nchw):
    """One fused prep pass: NCHW f32 -> channel-major space-to-depth bf16
    (N, 4*C1, H2*W2).  Producers emitting this layout can skip it entirely."""
    n, c1, h, w = x_nchw.shape
    assert h % 2 == 0 and w % 2 == 0, (h, w)
    xs = _space_to_depth(x_nchw)                       # (N, 4*C1, H2, W2)
    return xs.reshape(n, 4 * c1, -1).astype(jnp.bfloat16)


def focus_pallas_packed(x_packed, w_k, b_k, out_dtype=jnp.bfloat16):
    """x_packed: (N, 4*C1, M) bf16; w_k: (C2, 4*C1) bf16; b_k: (C2, 1) f32."""
    n, k4, m = x_packed.shape
    c2 = w_k.shape[0]
    vmem_cap = _vmem_capacity()
    tm = _pick_tm(m, k4, c2, n, out_dtype, vmem_cap)
    nm = pl.cdiv(m, tm)

    return pl.pallas_call(
        _focus_kernel,
        out_shape=jax.ShapeDtypeStruct((n, c2, m), out_dtype),
        grid=(n, nm),
        in_specs=[
            pl.BlockSpec((1, k4, tm), lambda i, j: (i, 0, j)),
            pl.BlockSpec((c2, k4), lambda i, j: (0, 0)),
            pl.BlockSpec((c2, 1), lambda i, j: (0, 0)),
        ],
        out_specs=pl.BlockSpec((1, c2, tm), lambda i, j: (i, 0, j)),
        compiler_params=pltpu.CompilerParams(
            dimension_semantics=("parallel", "parallel"),
            vmem_limit_bytes=int(vmem_cap * 3 // 4),
        ),
    )(x_packed, w_k, b_k)


def focus_pallas(x_nchw, w_k, b_k, out_dtype=jnp.bfloat16):
    """PyTorch-compatible entry: x_nchw (N, C1, H, W) f32 -> (N, C2, H/2, W/2)."""
    n, _, h, w = x_nchw.shape
    y = focus_pallas_packed(space_to_depth_pack(x_nchw), w_k, b_k, out_dtype)
    return y.reshape(n, -1, h // 2, w // 2)


# ------------------------- parameter construction --------------------------

def make_raw_params(key, c1, c2):
    """Synthetic params matching Focus.__init__ (Conv2d(4*c1, c2, 1, bias=False) + BN(c2))."""
    cin = 4 * c1
    ks = jax.random.split(key, 5)
    return {
        "w": jax.random.normal(ks[0], (c2, cin), jnp.float32) / jnp.sqrt(cin),
        "g": 1.0 + 0.1 * jax.random.normal(ks[1], (c2,), jnp.float32),
        "beta": 0.1 * jax.random.normal(ks[2], (c2,), jnp.float32),
        "m": 0.05 * jax.random.normal(ks[3], (c2,), jnp.float32),
        "v": 1.0 + 0.1 * jnp.abs(jax.random.normal(ks[4], (c2,), jnp.float32)),
    }


def fold_bn(p, eps=1e-5):
    """Fold eval-mode BatchNorm into the 1x1 conv: (w_eff (C2, 4*C1), b_eff (C2,)) in f32."""
    s = p["g"] / jnp.sqrt(p["v"] + eps)
    w_eff = p["w"] * s[:, None]
    b_eff = p["beta"] - p["m"] * s
    return w_eff, b_eff


def pack_params_for_kernel(w_eff, b_eff):
    """Kernel dtypes/shapes: weight (C2, 4*C1) bf16, bias (C2, 1) f32.
    Channel order already matches the PyTorch concat order used in packing."""
    return w_eff.astype(jnp.bfloat16), b_eff.reshape(-1, 1).astype(jnp.float32)


# --------------------------- pure-JAX references ----------------------------

def focus_reference(x_nchw, p, eps=1e-5):
    """Faithful f32 Focus forward (eval-mode BN, SiLU), NCHW like PyTorch."""
    x = x_nchw.astype(jnp.float32)
    xs = _space_to_depth(x)                                       # (N, 4C1, H2, W2)
    y = jnp.einsum("nkhw,ok->nohw", xs, p["w"], precision="highest")
    s = p["g"] / jnp.sqrt(p["v"] + eps)
    y = (y - p["m"].reshape(1, -1, 1, 1)) * s.reshape(1, -1, 1, 1) \
        + p["beta"].reshape(1, -1, 1, 1)
    return y * jax.nn.sigmoid(y)


def focus_reference_quantized(x_nchw, w_eff, b_eff, out_dtype=jnp.bfloat16):
    """Kernel-matched math (bf16 x/w, f32 accumulation, out_dtype store) in plain JAX."""
    xs = _space_to_depth(x_nchw).astype(jnp.bfloat16).astype(jnp.float32)
    w = w_eff.astype(jnp.bfloat16).astype(jnp.float32)             # (C2, 4C1)
    y = jnp.einsum("nkhw,ok->nohw", xs, w, precision="highest") \
        + b_eff.reshape(1, -1, 1, 1)
    return (y * jax.nn.sigmoid(y)).astype(out_dtype)


# ---------------------------------- main ------------------------------------

if __name__ == "__main__":
    N, C1, H, W = 2, 4, 16, 16
    C2 = 32

    key = jax.random.PRNGKey(0)
    kx, kp = jax.random.split(key)
    x = jax.random.normal(kx, (N, C1, H, W), jnp.float32)

    raw = make_raw_params(kp, C1, C2)
    w_eff, b_eff = fold_bn(raw)
    w_k, b_k = pack_params_for_kernel(w_eff, b_eff)

    out = jax.block_until_ready(jax.jit(focus_pallas)(x, w_k, b_k))
    assert out.shape == (N, C2, H // 2, W // 2), out.shape
    out_f32 = out.astype(jnp.float32)

    # Tight check: kernel vs a quantization-matched reference (same bf16 rounding).
    ref_q = jax.block_until_ready(
        focus_reference_quantized(x, w_eff, b_eff)).astype(jnp.float32)
    assert jnp.allclose(out_f32, ref_q, rtol=1e-2, atol=1e-2), \
        float(jnp.max(jnp.abs(out_f32 - ref_q)))

    # Module-semantics check: vs the faithful f32 Focus forward (bf16 tolerance).
    ref = jax.block_until_ready(focus_reference(x, raw))
    assert jnp.allclose(out_f32, ref, rtol=6e-2, atol=6e-2), \
        float(jnp.max(jnp.abs(out_f32 - ref)))

    print("KERNEL_OK")
</pallas_src>

<mosaic_0001>
module attributes {stable_mosaic.version = 11 : i64} {
  func.func @_focus_kernel(%arg0: i32, %arg1: i32, %arg2: memref<1x16x64xbf16, #tpu.memory_space<vmem>>, %arg3: memref<32x16xbf16, #tpu.memory_space<vmem>>, %arg4: memref<32x1xf32, #tpu.memory_space<vmem>>, %arg5: memref<1x32x64xbf16, #tpu.memory_space<vmem>>) attributes {dimension_semantics = [#tpu.dimension_semantics<parallel>, #tpu.dimension_semantics<parallel>], iteration_bounds = array<i64: 2, 1>, scalar_prefetch = 0 : i64, scratch_operands = 0 : i64, tpu.core_type = #tpu.core_type<tc>, window_params = [{transform_indices = @transform_0, window_bounds = array<i64: 1, 16, 64>}, {pipeline_mode = #tpu.pipeline_mode<synchronous>, transform_indices = @transform_1, window_bounds = array<i64: 32, 16>}, {pipeline_mode = #tpu.pipeline_mode<synchronous>, transform_indices = @transform_2, window_bounds = array<i64: 32, 1>}, {transform_indices = @transform_3, window_bounds = array<i64: 1, 32, 64>}]} {
    %c0 = arith.constant 0 : index
    %c0_0 = arith.constant 0 : index
    %0 = vector.load %arg3[%c0, %c0_0] : memref<32x16xbf16, #tpu.memory_space<vmem>>, vector<32x16xbf16>
    %c0_1 = arith.constant 0 : index
    %c0_2 = arith.constant 0 : index
    %c0_3 = arith.constant 0 : index
    %1 = vector.load %arg2[%c0_1, %c0_2, %c0_3] : memref<1x16x64xbf16, #tpu.memory_space<vmem>>, vector<1x16x64xbf16>
    %2 = vector.shape_cast %1 : vector<1x16x64xbf16> to vector<16x64xbf16>
    %cst = arith.constant dense<0.000000e+00> : vector<32x64xf32>
    %3 = tpu.matmul %0, %2, %cst {dimension_numbers = #tpu.dot_dimension_numbers<[1], [0], [0], [1], [0, 0, 1, 1], [], []>} : vector<32x16xbf16>, vector<16x64xbf16>, vector<32x64xf32> -> vector<32x64xf32>
    %c0_4 = arith.constant 0 : index
    %c0_5 = arith.constant 0 : index
    %4 = vector.load %arg4[%c0_4, %c0_5] : memref<32x1xf32, #tpu.memory_space<vmem>>, vector<32x1xf32>
    %5 = vector.broadcast %4 : vector<32x1xf32> to vector<32x64xf32>
    %6 = arith.addf %3, %5 : vector<32x64xf32>
    %7 = arith.negf %6 : vector<32x64xf32>
    %8 = math.exp %7 : vector<32x64xf32>
    %cst_6 = arith.constant 1.000000e+00 : f32
    %9 = vector.broadcast %cst_6 : f32 to vector<32x64xf32>
    %10 = arith.addf %9, %8 : vector<32x64xf32>
    %11 = arith.divf %9, %10 : vector<32x64xf32>
    %12 = arith.mulf %6, %11 : vector<32x64xf32>
    %13 = arith.truncf %12 : vector<32x64xf32> to vector<32x64xbf16>
    %c0_7 = arith.constant 0 : index
    %c0_8 = arith.constant 0 : index
    %c0_9 = arith.constant 0 : index
    %14 = vector.load %arg5[%c0_7, %c0_8, %c0_9] : memref<1x32x64xbf16, #tpu.memory_space<vmem>>, vector<1x32x64xbf16>
    %15 = vector.shape_cast %14 : vector<1x32x64xbf16> to vector<32x64xbf16>
    %16 = vector.shape_cast %13 : vector<32x64xbf16> to vector<1x32x64xbf16>
    tpu.vector_store %arg5[%c0_7, %c0_8, %c0_9], %16 {strides = array<i32>} : memref<1x32x64xbf16, #tpu.memory_space<vmem>>, vector<1x32x64xbf16>,
    return
  }
  func.func @transform_0(%arg0: i32, %arg1: i32) -> (i32, i32, i32) {
    %c0_i32 = arith.constant 0 : i32
    %c0_i32_0 = arith.constant 0 : i32
    return %arg0, %c0_i32, %arg1 : i32, i32, i32
  }
  func.func @transform_1(%arg0: i32, %arg1: i32) -> (i32, i32) {
    %c0_i32 = arith.constant 0 : i32
    %c0_i32_0 = arith.constant 0 : i32
    %c0_i32_1 = arith.constant 0 : i32
    return %c0_i32, %c0_i32_0 : i32, i32
  }
  func.func @transform_2(%arg0: i32, %arg1: i32) -> (i32, i32) {
    %c0_i32 = arith.constant 0 : i32
    %c0_i32_0 = arith.constant 0 : i32
    %c0_i32_1 = arith.constant 0 : i32
    return %c0_i32, %c0_i32_0 : i32, i32
  }
  func.func @transform_3(%arg0: i32, %arg1: i32) -> (i32, i32, i32) {
    %c0_i32 = arith.constant 0 : i32
    %c0_i32_0 = arith.constant 0 : i32
    return %arg0, %c0_i32, %arg1 : i32, i32, i32
  }
}

</mosaic_0001>

<llo_original>
// kernel: focus_pallas.1
$region0: #{focus_pallas.1}
  #allocation0 [shape = 'u32[]', space=smem, size = 0x4, offset = 0x4, fixed_abs, tag = 'smem constant byte address 0x4 - core index']
  #allocation1 [shape = 'u32[72,128]{1,0:T(1,128)}', space=vmem, size = 0x9000, scoped, tag = 'internal scratch']
  %s0 = inlined_call_operand.vmem [shape: bf16[2,16,64], index: 0, kind: input, shape index: {}]
  %s1 = inlined_call_operand.vmem [shape: bf16[32,16], index: 1, kind: input, shape index: {}]
  %s2 = inlined_call_operand.vmem [shape: f32[32,1], index: 2, kind: input, shape index: {}]
  %s3 = inlined_call_operand.vmem [shape: bf16[2,32,64], index: 3, kind: output, shape index: {}]
  %s4 = sld [smem:[#allocation0]]
  $region45: #{focus_pallas.1} parent=0
    _
  %s6 = ssub.s32 1, %s4
  %s7 = scalar_select 0, %s6, %s4
  loop: start=0, step=1, limit=4
  $region2: #{focus_pallas.1} parent=0 // loop_pre_header
    _
  $region3: #{focus_pallas.1} parent=0 // loop_header
    %s9 = sphi 0, %s13
    %p10 = scmp.ge.s32.totalorder %s9, 4
    %s16 = sphi 0, %s28
    %s17 = sphi 0, %s24
    %s18 = sphi 0, %s16
    %s19 = sphi 0, %s17
    %s20 = sphi 0, %s18
    %s21 = sphi 0, %s19
    %s33 = sphi 0, %s35
    %s36 = sphi 0, %s33
    %s37 = sphi 0, %s36
    %s53 = sphi 0, %s37
    %s57 = sphi 0, %s57
    %s59 = sphi 0, %s57
    %s60 = sphi 0, %s59
    %s74 = sphi 0, %s60
    %s78 = sphi 0, %s78
    %s80 = sphi 0, %s78
    %s81 = sphi 0, %s80
    %s95 = sphi 0, %s81
    %s103 = sphi 0, %s105
    %s106 = sphi 0, %s103
    %s107 = sphi 0, %s106
    %s123 = sphi 0, %s107
  $region4: #{focus_pallas.1} parent=0 // loop_header_branch
    %12 = sbr.rel (%p10) target = $region8
  $region5: #{focus_pallas.1} parent=0 // loop_body
    %s14 = ssub.s32 %s9, 1
    %s15 = ssub.s32 %s9, 2
    %s22 = sadd.s32 1, %s17
    %p23 = scmp.ge.s32.totalorder %s22, 1
    %s24 = scalar_select %p23, 0, %s22
    %s25 = sadd.s32 1, %s16
    %s26 = scalar_select %p23, %s25, %s16
    %p27 = scmp.ge.s32.totalorder %s26, 2
    %s28 = scalar_select %p27, 0, %s26
    %s29 = ssub.s32 %s16, %s28
    %s30 = ssub.s32 %s17, %s24
    %s31 = sor.u32 %s29, %s30
    %p32 = scmp.eq.s32.totalorder %s31, 0
    %s34 = sadd.s32 %s33, 1
    %s35 = scalar_select %p32, %s33, %s34
    %p38 = pneg %p32
    %p39 = scmp.eq.s32.totalorder %s9, 1
    %p40 = por %p38, %p39
    %p41 = scmp.ne.s32.totalorder %s33, %s36
    %p42 = scmp.eq.s32.totalorder %s9, 0
    %p43 = por %p41, %p42
    %p44 = scmp.ne.s32.totalorder %s33, %s36
    %p45 = scmp.eq.s32.totalorder %s14, 1
    %p46 = por %p44, %p45
    %p47 = scmp.ne.s32.totalorder %s36, %s37
    %p48 = scmp.eq.s32.totalorder %s14, 0
    %p49 = por %p47, %p48
    %p50 = scmp.ne.s32.totalorder %s36, %s37
    %p51 = scmp.eq.s32.totalorder %s15, 1
    %p52 = por %p50, %p51
    %p54 = scmp.ne.s32.totalorder %s37, %s53
    %p55 = scmp.eq.s32.totalorder %s15, 0
    %p56 = por %p54, %p55
    %s58 = sadd.s32 %s57, 1
    %p61 = scmp.eq.s32.totalorder %s9, 1
    %p62 = scmp.ne.s32.totalorder %s57, %s59
    %p63 = scmp.eq.s32.totalorder %s9, 0
    %p64 = por %p62, %p63
    %p65 = scmp.ne.s32.totalorder %s57, %s59
    %p66 = scmp.eq.s32.totalorder %s14, 1
    %p67 = por %p65, %p66
    %p68 = scmp.ne.s32.totalorder %s59, %s60
    %p69 = scmp.eq.s32.totalorder %s14, 0
    %p70 = por %p68, %p69
    %p71 = scmp.ne.s32.totalorder %s59, %s60
    %p72 = scmp.eq.s32.totalorder %s15, 1
    %p73 = por %p71, %p72
    %p75 = scmp.ne.s32.totalorder %s60, %s74
    %p76 = scmp.eq.s32.totalorder %s15, 0
    %p77 = por %p75, %p76
    %s79 = sadd.s32 %s78, 1
    %p82 = scmp.eq.s32.totalorder %s9, 1
    %p83 = scmp.ne.s32.totalorder %s78, %s80
    %p84 = scmp.eq.s32.totalorder %s9, 0
    %p85 = por %p83, %p84
    %p86 = scmp.ne.s32.totalorder %s78, %s80
    %p87 = scmp.eq.s32.totalorder %s14, 1
    %p88 = por %p86, %p87
    %p89 = scmp.ne.s32.totalorder %s80, %s81
    %p90 = scmp.eq.s32.totalorder %s14, 0
    %p91 = por %p89, %p90
    %p92 = scmp.ne.s32.totalorder %s80, %s81
    %p93 = scmp.eq.s32.totalorder %s15, 1
    %p94 = por %p92, %p93
    %p96 = scmp.ne.s32.totalorder %s81, %s95
    %p97 = scmp.eq.s32.totalorder %s15, 0
    %p98 = por %p96, %p97
    %s99 = ssub.s32 %s16, %s28
    %s100 = ssub.s32 %s17, %s24
    %s101 = sor.u32 %s99, %s100
    %p102 = scmp.eq.s32.totalorder %s101, 0
    %s104 = sadd.s32 %s103, 1
    %s105 = scalar_select %p102, %s103, %s104
    %p108 = pneg %p102
    %p109 = scmp.eq.s32.totalorder %s9, 1
    %p110 = por %p108, %p109
    %p111 = scmp.ne.s32.totalorder %s103, %s106
    %p112 = scmp.eq.s32.totalorder %s9, 0
    %p113 = por %p111, %p112
    %p114 = scmp.ne.s32.totalorder %s103, %s106
    %p115 = scmp.eq.s32.totalorder %s14, 1
    %p116 = por %p114, %p115
    %p117 = scmp.ne.s32.totalorder %s106, %s107
    %p118 = scmp.eq.s32.totalorder %s14, 0
    %p119 = por %p117, %p118
    %p120 = scmp.ne.s32.totalorder %s106, %s107
    %p121 = scmp.eq.s32.totalorder %s15, 1
    %p122 = por %p120, %p121
    %p124 = scmp.ne.s32.totalorder %s107, %s123
    %p125 = scmp.eq.s32.totalorder %s15, 0
    %p126 = por %p124, %p125
    %p127 = scmp.le.s32.totalorder 1, %s9
    %p128 = scmp.lt.s32.totalorder %s9, 3
    %p129 = pnand %p127, %p128
    %p130 = pneg %p129
    // Predicated region
    $region9: #{focus_pallas.1} parent=5 // pred_check
      _
    $region10: #{focus_pallas.1} parent=5 // pred_check_branch
      %132 = sbr.rel (%p129) target = $region12
    $region11: #{focus_pallas.1} parent=5 // pred_region
      %s133 = ssub.s32 %s9, 1
      // Predicated region
      $region13: #{focus_pallas.1} parent=11 // pred_check
        %p134 = pneg %p70
      $region14: #{focus_pallas.1} parent=11 // pred_check_branch
        %136 = sbr.rel (%p134) target = $region16
      $region15: #{focus_pallas.1} parent=11 // pred_region
        _
      $region16: #{focus_pallas.1} parent=11 // pred_fallthru
        _
      // Predicated region
      $region17: #{focus_pallas.1} parent=11 // pred_check
        %p137 = pneg %p91
      $region18: #{focus_pallas.1} parent=11 // pred_check_branch
        %139 = sbr.rel (%p137) target = $region20
      $region19: #{focus_pallas.1} parent=11 // pred_region
        _
      $region20: #{focus_pallas.1} parent=11 // pred_fallthru
        _
    $region12: #{focus_pallas.1} parent=5 // pred_fallthru
      _
    %p140 = scmp.lt.s32.totalorder %s9, 2
    // Predicated region
    $region21: #{focus_pallas.1} parent=5 // pred_check
      %p141 = pneg %p140
    $region22: #{focus_pallas.1} parent=5 // pred_check_branch
      %143 = sbr.rel (%p141) target = $region24
    $region23: #{focus_pallas.1} parent=5 // pred_region
      // Predicated region
      $region25: #{focus_pallas.1} parent=23 // pred_check
        %p144 = pneg %p43
      $region26: #{focus_pallas.1} parent=23 // pred_check_branch
        %146 = sbr.rel (%p144) target = $region28
      $region27: #{focus_pallas.1} parent=23 // pred_region
        %p147 = scmp.lt.s32.totalorder %s16, 1
        %s148 = scalar_select %p147, %s16, 1
        %p149 = scmp.lt.s32.totalorder %s17, 0
        %s150 = scalar_select %p149, %s17, 0
        %s151 = smul.addr %s148, 2
        %s152 = sadd.s32 %s150, %s151
        %s153 = smul.addr %s152, 4
        %s154 = scalar_lea.vmem %s0, %s153
      $region28: #{focus_pallas.1} parent=23 // pred_fallthru
        _
    $region24: #{focus_pallas.1} parent=5 // pred_fallthru
      _
    %p155 = scmp.le.s32.totalorder 1, %s9
    %p156 = scmp.lt.s32.totalorder %s9, 3
    %p157 = pnand %p155, %p156
    %p158 = pneg %p157
    // Predicated region
    $region29: #{focus_pallas.1} parent=5 // pred_check
      _
    $region30: #{focus_pallas.1} parent=5 // pred_check_branch
      %160 = sbr.rel (%p157) target = $region32
    $region31: #{focus_pallas.1} parent=5 // pred_region
      %s161 = ssub.s32 %s9, 1
      %p162 = scmp.lt.s32.totalorder %s18, 1
      %s163 = scalar_select %p162, %s18, 1
      %p164 = scmp.lt.s32.totalorder %s19, 0
      %s165 = scalar_select %p164, %s19, 0
      %s166 = smul.addr %s163, 2
      %s167 = sadd.s32 %s165, %s166
      %s168 = smul.addr %s167, 4
      %s169 = scalar_lea.vmem %s0, %s168
      %p170 = pneg %p49
      %p171 = pneg %p46
      %p172 = pneg %p70
      %p173 = pneg %p67
      %p174 = pneg %p91
      %p175 = pneg %p88
      %p176 = pneg %p119
      %p177 = pneg %p116
      %p178 = scmp.lt.s32.totalorder %s18, 1
      %s179 = scalar_select %p178, %s18, 1
      %p180 = scmp.lt.s32.totalorder %s19, 0
      %s181 = scalar_select %p180, %s19, 0
      %s182 = smul.addr %s179, 4
      %s183 = sadd.s32 %s181, %s182
      %s184 = smul.addr %s183, 4
      %s185 = scalar_lea.vmem %s3, %s184
      %p186 = scmp.lt.s32.totalorder %s18, 1
      %s187 = scalar_select %p186, %s18, 1
      %p188 = scmp.lt.s32.totalorder %s19, 0
      %s189 = scalar_select %p188, %s19, 0
      %s190 = smul.addr %s187, 2
      %s191 = sadd.s32 %s189, %s190
      %s192 = smul.addr %s191, 4
      %s193 = scalar_lea.vmem %s0, %s192
      %p194 = scmp.lt.s32.totalorder %s18, 1
      %s195 = scalar_select %p194, %s18, 1
      %p196 = scmp.lt.s32.totalorder %s19, 0
      %s197 = scalar_select %p196, %s19, 0
      %s198 = smul.addr %s195, 4
      %s199 = sadd.s32 %s197, %s198
      %s200 = smul.addr %s199, 4
      %s201 = scalar_lea.vmem %s3, %s200
      %v203 = vld [vmem:[%s1] sm:$0xf]
      %v204 = vld [vmem:[%s1 + $0x4] sm:$0xf]
      %v205 = vld [vmem:[%s1 + $0x8] sm:$0xf]
      %v206 = vld [vmem:[%s1 + $0xc] sm:$0xf]
      %v207 = vld [vmem:[%s193] sm:$0xf]
      %v208 = vld [vmem:[%s193 + $0x4] sm:$0xf]
      %v209 = vld [vmem:[%s2] sm:$0xff]
      %v210 = vld [vmem:[%s2 + $0x8] sm:$0xff]
      %v211 = vld [vmem:[%s2 + $0x10] sm:$0xff]
      %v212 = vld [vmem:[%s2 + $0x18] sm:$0xff]
      %214 = vset.pattern.permute.xlu0 0
      %215 = vperm.xlu0 %214, %v209
      %v216 = vpop.permute.xlu0 %215
      %219 = vset.pattern.permute.xlu0 0
      %220 = vperm.xlu0 %219, %v210
      %v221 = vpop.permute.xlu0 %220
      %224 = vset.pattern.permute.xlu0 0
      %225 = vperm.xlu0 %224, %v211
      %v226 = vpop.permute.xlu0 %225
      %229 = vset.pattern.permute.xlu0 0
      %230 = vperm.xlu0 %229, %v212
      %v231 = vpop.permute.xlu0 %230
      %v237 = vunpack.c.l.b16 %v203
      %v238 = vunpack.c.l.b16 %v204
      %v239 = vunpack.c.l.b16 %v205
      %v240 = vunpack.c.l.b16 %v206
      %v241 = vpack.c.b16 %v238, %v237
      %v242 = vpack.c.b16 %v240, %v239
      %v245 = vunpack.c.l.b16 %v207
      %v246 = vunpack.c.l.b16 %v208
      %v247 = vpack.c.b16 %v246, %v245
      %vm249 = vcmask 130048
      %v251 = vsel %vm249, %v241, 0
      %v254 = vsel %vm249, %v242, 0
      %256 = vmatpush.bf16.msra.mxu0 0
      %257 = vmatpush.bf16.msra.mxu0 0
      %258 = vmatpush.bf16.msra.mxu0 0
      %259 = vmatpush.bf16.msra.mxu0 0
      %260 = vmatpush.bf16.msra.mxu0 0
      %261 = vmatpush.bf16.msra.mxu0 0
      %262 = vmatpush.bf16.msra.mxu0 0
      %263 = vmatpush.bf16.msra.mxu0 %v247
      %264 = vmatmul.bf16.gmra.mxu0 %v251
      %v265 = vpop.f32.mrf.mxu0
      %v266 = vadd.f32 %v216, %v265
      %v267 = vpop.f32.mrf.mxu0
      %v268 = vadd.f32 %v221, %v267
      %269 = vmatmul.bf16.gmra.mxu0 %v254
      %v270 = vpop.f32.mrf.mxu0
      %v271 = vadd.f32 %v226, %v270
      %v272 = vpop.f32.mrf.mxu0
      %v273 = vadd.f32 %v231, %v272
      %274 = vdwg.mxu0
      %v275 = vxor.u32 %v266, 2147483648
      %v276 = vxor.u32 %v268, 2147483648
      %v277 = vxor.u32 %v271, 2147483648
      %v278 = vxor.u32 %v273, 2147483648
      %v279 = vmul.f32 %v275, 1.442695
      %v280 = vpow.pop %v279
      %v281 = vmul.f32 %v276, 1.442695
      %v282 = vpow.pop %v281
      %v283 = vmul.f32 %v277, 1.442695
      %v284 = vpow.pop %v283
      %v285 = vmul.f32 %v278, 1.442695
      %v286 = vpow.pop %v285
      %v287 = vadd.f32 %v280, 1.0
      %v288 = vadd.f32 %v282, 1.0
      %v289 = vadd.f32 %v284, 1.0
      %v290 = vadd.f32 %v286, 1.0
      %v291 = vrcp.pop %v287
      %v292 = vmul.f32 %v287, %v291
      %v293 = vsub.f32 1.0, %v292
      %v294 = vmul.f32 %v291, %v293
      %v295 = vadd.f32 %v291, %v294
      %vm296 = vweird.f32 %v287
      %vm297 = vweird.f32 %v291
      %vm298 = vmor %vm296, %vm297
      %v299 = vsel %vm298, %v291, %v295
      %v300 = vand.u32 2147483647, %v287
      %vm301 = vcmp.eq.f32.partialorder %v300, 8.507059e+37
      %v302 = vand.u32 %v287, 2147483648
      %v303 = vor.u32 1.1754944e-38, %v302
      %v304 = vsel %vm301, %v303, %v299
      %v305 = vmul.f32 1.0, %v304
      %v306 = vrcp.pop %v288
      %v307 = vmul.f32 %v288, %v306
      %v308 = vsub.f32 1.0, %v307
      %v309 = vmul.f32 %v306, %v308
      %v310 = vadd.f32 %v306, %v309
      %vm311 = vweird.f32 %v288
      %vm312 = vweird.f32 %v306
      %vm313 = vmor %vm311, %vm312
      %v314 = vsel %vm313, %v306, %v310
      %v315 = vand.u32 2147483647, %v288
      %vm316 = vcmp.eq.f32.partialorder %v315, 8.507059e+37
      %v317 = vand.u32 %v288, 2147483648
      %v318 = vor.u32 1.1754944e-38, %v317
      %v319 = vsel %vm316, %v318, %v314
      %v320 = vmul.f32 1.0, %v319
      %v321 = vrcp.pop %v289
      %v322 = vmul.f32 %v289, %v321
      %v323 = vsub.f32 1.0, %v322
      %v324 = vmul.f32 %v321, %v323
      %v325 = vadd.f32 %v321, %v324
      %vm326 = vweird.f32 %v289
      %vm327 = vweird.f32 %v321
      %vm328 = vmor %vm326, %vm327
      %v329 = vsel %vm328, %v321, %v325
      %v330 = vand.u32 2147483647, %v289
      %vm331 = vcmp.eq.f32.partialorder %v330, 8.507059e+37
      %v332 = vand.u32 %v289, 2147483648
      %v333 = vor.u32 1.1754944e-38, %v332
      %v334 = vsel %vm331, %v333, %v329
      %v335 = vmul.f32 1.0, %v334
      %v336 = vrcp.pop %v290
      %v337 = vmul.f32 %v290, %v336
      %v338 = vsub.f32 1.0, %v337
      %v339 = vmul.f32 %v336, %v338
      %v340 = vadd.f32 %v336, %v339
      %vm341 = vweird.f32 %v290
      %vm342 = vweird.f32 %v336
      %vm343 = vmor %vm341, %vm342
      %v344 = vsel %vm343, %v336, %v340
      %v345 = vand.u32 2147483647, %v290
      %vm346 = vcmp.eq.f32.partialorder %v345, 8.507059e+37
      %v347 = vand.u32 %v290, 2147483648
      %v348 = vor.u32 1.1754944e-38, %v347
      %v349 = vsel %vm346, %v348, %v344
      %v350 = vmul.f32 1.0, %v349
      %v351 = vmul.f32 %v266, %v305
      %v352 = vmul.f32 %v268, %v320
      %v353 = vmul.f32 %v271, %v335
      %v354 = vmul.f32 %v273, %v350
      %v355 = vpack.c.bf16 %v351, %v351
      %v356 = vpack.c.bf16 %v352, %v352
      %v357 = vpack.c.bf16 %v353, %v353
      %v358 = vpack.c.bf16 %v354, %v354
      %vm359 = vcmask 519168
      %360 = vst.msk [vmem:[%s201] sm:$0xf] %vm359, %v355
      %361 = vst.msk [vmem:[%s201 + $0x4] sm:$0xf] %vm359, %v356
      %362 = vst.msk [vmem:[%s201 + $0x8] sm:$0xf] %vm359, %v357
      %363 = vst.msk [vmem:[%s201 + $0xc] sm:$0xf] %vm359, %v358
      %p364 = scmp.lt.s32.totalorder %s18, 1
      %s365 = scalar_select %p364, %s18, 1
      %p366 = scmp.lt.s32.totalorder %s19, 0
      %s367 = scalar_select %p366, %s19, 0
      %s368 = smul.addr %s365, 4
      %s369 = sadd.s32 %s367, %s368
      %s370 = smul.addr %s369, 4
      %s371 = scalar_lea.vmem %s3, %s370
      // Predicated region
      $region33: #{focus_pallas.1} parent=31 // pred_check
        %p372 = pneg %p116
      $region34: #{focus_pallas.1} parent=31 // pred_check_branch
        %374 = sbr.rel (%p372) target = $region36
      $region35: #{focus_pallas.1} parent=31 // pred_region
        _
      $region36: #{focus_pallas.1} parent=31 // pred_fallthru
        _
    $region32: #{focus_pallas.1} parent=5 // pred_fallthru
      _
    %p375 = scmp.le.s32.totalorder 2, %s9
    // Predicated region
    $region37: #{focus_pallas.1} parent=5 // pred_check
      %p376 = pneg %p375
    $region38: #{focus_pallas.1} parent=5 // pred_check_branch
      %378 = sbr.rel (%p376) target = $region40
    $region39: #{focus_pallas.1} parent=5 // pred_region
      %s379 = ssub.s32 %s9, 2
      // Predicated region
      $region41: #{focus_pallas.1} parent=39 // pred_check
        %p380 = pneg %p122
      $region42: #{focus_pallas.1} parent=39 // pred_check_branch
        %382 = sbr.rel (%p380) target = $region44
      $region43: #{focus_pallas.1} parent=39 // pred_region
        %p383 = scmp.lt.s32.totalorder %s20, 1
        %s384 = scalar_select %p383, %s20, 1
        %p385 = scmp.lt.s32.totalorder %s21, 0
        %s386 = scalar_select %p385, %s21, 0
        %s387 = smul.addr %s384, 4
        %s388 = sadd.s32 %s386, %s387
        %s389 = smul.addr %s388, 4
        %s390 = scalar_lea.vmem %s3, %s389
      $region44: #{focus_pallas.1} parent=39 // pred_fallthru
        _
    $region40: #{focus_pallas.1} parent=5 // pred_fallthru
      _
  $region6: #{focus_pallas.1} parent=0 // loop_footer
    %s13 = sadd.s32 1, %s9
  $region7: #{focus_pallas.1} parent=0 // loop_footer_branch
    %8 = sbr.rel target = $region3
  $region8: #{focus_pallas.1} parent=0 // loop_exit
    _

</llo_original>
